<compile_context>
chip_gen: v6e
topology: v6e:2x2x1
jax: 0.10.0
libtpu: 0.0.40
codegen_flags: <defaults>
</compile_context>

<pallas_src>
import jax
import jax.numpy as jnp
from jax.experimental import pallas as pl
from jax.experimental.pallas import tpu as pltpu

H1 = 256
H2 = 128
BN_EPS = 1e-5


def _round_up(n, m):
    return ((n + m - 1) // m) * m


def _vmem_capacity_bytes():
    """Per-core VMEM capacity; conservative (v7x) fallback if query fails."""
    try:
        cap = getattr(pltpu.get_tpu_info(), "vmem_capacity_bytes", None)
        if cap:
            return int(cap)
    except Exception:
        pass
    return 64 << 20


def _choose_tb(B, sub, tb):
    """Batch tile size. Single minimal-padding tile for small B; balanced
    >=2-step grid (v7x megacore) with tb % 128 == 0 (lane-dense out) else."""
    if tb is not None:
        tb = max(int(tb), sub)
        if tb >= B:
            return _round_up(B, sub)          # single tile
        return _round_up(tb, 128)             # multi-tile: out lane dim % 128
    if B <= 512:
        return _round_up(B, sub)               # single tile, <= sub rows padding
    n_tiles = max(2, pl.cdiv(B, 1024))         # >= 2 grid steps, ~1K rows/tile
    return _round_up(pl.cdiv(B, n_tiles), 128)


def _mtrn_kernel(x_ref, w1_ref, b1_ref, w2_ref, b2_ref, wht_ref, bht_ref, out_ref):
    cdt = w1_ref.dtype  # compute dtype of the matmul operands (bf16 or f32)

    # shared[0..3]: Linear(D,256) with eval-BN folded into W1/b1, ReLU
    # (Dropout(0.3) is identity in eval mode).
    h = jnp.dot(x_ref[...], w1_ref[...], preferred_element_type=jnp.float32)
    h = jnp.maximum(h + b1_ref[...], 0.0)                      # [TB, 256] f32

    # shared[4..5]: Linear(256,128) + ReLU.
    h2 = jnp.dot(h.astype(cdt), w2_ref[...], preferred_element_type=jnp.float32)
    h2 = jnp.maximum(h2 + b2_ref[...], 0.0)                    # [TB, 128] f32

    # Fused heads, lane-dense: [2, TB] = Wh^T @ h2^T, expressed as
    # dot_general(Wh^T [2,128], h2 [TB,128]) contracting the last dim of both.
    heads = jax.lax.dot_general(
        wht_ref[...], h2.astype(cdt),
        dimension_numbers=(((1,), (1,)), ((), ())),
        preferred_element_type=jnp.float32)                    # [2, TB] f32
    heads = heads + bht_ref[...]                               # bias [2, 1]

    # Row 0 = rank_head score (identity), row 1 = sigmoid(class logit).
    row = jax.lax.broadcasted_iota(jnp.int32, heads.shape, 0)
    out_ref[...] = jnp.where(row == 0, heads, jax.nn.sigmoid(heads))


def multi_task_rank_net(x, folded, *, tb=None):
    """x: [B, D]. `folded` from fold_params(). Returns (score [B], prob [B])."""
    B, D = x.shape
    compute_dtype = folded["w1"].dtype
    itemsize = jnp.dtype(compute_dtype).itemsize
    sub = 16 if jnp.dtype(compute_dtype) == jnp.dtype(jnp.bfloat16) else 8

    tb = _choose_tb(B, sub, tb)
    b_pad = _round_up(B, tb)
    grid = (b_pad // tb,)

    xp = x.astype(compute_dtype)
    if b_pad != B:
        xp = jnp.pad(xp, ((0, b_pad - B), (0, 0)))

    # VMEM budget: double-buffered x + single-buffered resident params +
    # double-buffered [2, tb] f32 out + h/h2 intermediates + headroom.
    w_bytes = (D * H1 + H1 * H2 + 2 * H2) * itemsize + (H1 + H2 + 2) * 4
    vmem_needed = (2 * tb * D * itemsize
                   + w_bytes
                   + 2 * 2 * tb * 4
                   + tb * (H1 + H2) * (4 + itemsize)
                   + (2 << 20))
    vmem_limit = int(min(max(vmem_needed, 16 << 20),
                         (3 * _vmem_capacity_bytes()) // 4))

    cost = pl.CostEstimate(
        flops=2 * b_pad * (D * H1 + H1 * H2 + H2 * 2),
        transcendentals=2 * b_pad,
        bytes_accessed=b_pad * D * itemsize + w_bytes + 2 * b_pad * 4,
    )

    def _call(buffered):
        def const_spec(shape):
            # Grid-invariant operands: keep resident; single-buffer if allowed.
            if buffered is None:
                return pl.BlockSpec(shape, lambda i: (0, 0))
            return pl.BlockSpec(shape, lambda i: (0, 0), pipeline_mode=buffered)

        in_specs = [
            pl.BlockSpec((tb, D), lambda i: (i, 0)),   # x: streamed per tile
            const_spec((D, H1)),                       # W1 (BN-folded)
            const_spec((1, H1)),                       # b1 (BN-folded)
            const_spec((H1, H2)),                      # W2
            const_spec((1, H2)),                       # b2
            const_spec((2, H2)),                       # Wh^T (fused heads)
            const_spec((2, 1)),                        # bh^T
        ]
        out_specs = pl.BlockSpec((2, tb), lambda i: (0, i))  # lane-dense [2, TB]

        return pl.pallas_call(
            _mtrn_kernel,
            out_shape=jax.ShapeDtypeStruct((2, b_pad), jnp.float32),
            grid=grid,
            in_specs=in_specs,
            out_specs=out_specs,
            compiler_params=pltpu.CompilerParams(
                dimension_semantics=("parallel",),
                vmem_limit_bytes=vmem_limit,
            ),
            cost_estimate=cost,
        )(xp, folded["w1"], folded["b1"], folded["w2"], folded["b2"],
          folded["wht"], folded["bht"])

    try:
        out = _call(pl.Buffered(1))      # single-buffered resident params
    except Exception:
        out = _call(None)                # fallback: default (double) buffering

    # .squeeze(-1) glue + drop batch padding; row 0 = score, row 1 = prob.
    return out[0, :B], out[1, :B]


def fold_params(raw, compute_dtype=jnp.bfloat16):
    """One-time constant fold: BN(eval) into Linear#1, concat + transpose heads."""
    scale = raw["bn_g"] * jax.lax.rsqrt(raw["bn_v"] + BN_EPS)       # [1, 256]
    w1 = raw["w1"] * scale                                           # [D, 256]
    b1 = (raw["b1"] - raw["bn_m"]) * scale + raw["bn_b"]             # [1, 256]
    wht = jnp.concatenate([raw["wr"], raw["wc"]], axis=1).T          # [2, 128]
    bht = jnp.concatenate([raw["br"], raw["bc"]], axis=1).T          # [2, 1]
    return {
        "w1": w1.astype(compute_dtype),
        "b1": b1.astype(jnp.float32),
        "w2": raw["w2"].astype(compute_dtype),
        "b2": raw["b2"].astype(jnp.float32),
        "wht": wht.astype(compute_dtype),
        "bht": bht.astype(jnp.float32),
    }


def init_params(key, input_dim):
    """Deterministic synthetic parameters (PyTorch-shaped, stored transposed)."""
    ks = jax.random.split(key, 8)

    def lin(kw, kb, fan_in, fan_out):
        bound = 1.0 / jnp.sqrt(jnp.float32(fan_in))
        w = jax.random.uniform(kw, (fan_in, fan_out), jnp.float32, -bound, bound)
        b = jax.random.uniform(kb, (1, fan_out), jnp.float32, -bound, bound)
        return w, b

    w1, b1 = lin(ks[0], ks[1], input_dim, H1)
    w2, b2 = lin(ks[2], ks[3], H1, H2)
    wr, br = lin(ks[4], ks[5], H2, 1)
    wc, bc = lin(ks[6], ks[7], H2, 1)
    return {
        "w1": w1, "b1": b1,
        "bn_g": jnp.ones((1, H1), jnp.float32),
        "bn_b": jnp.zeros((1, H1), jnp.float32),
        "bn_m": jnp.zeros((1, H1), jnp.float32),
        "bn_v": jnp.ones((1, H1), jnp.float32),
        "w2": w2, "b2": b2,
        "wr": wr, "br": br,
        "wc": wc, "bc": bc,
    }


def _reference(x, p):
    """Pure-JAX reference from the RAW (unfused) params."""
    h = x @ p["w1"] + p["b1"]
    h = (h - p["bn_m"]) / jnp.sqrt(p["bn_v"] + BN_EPS) * p["bn_g"] + p["bn_b"]
    h = jnp.maximum(h, 0.0)
    h = jnp.maximum(h @ p["w2"] + p["b2"], 0.0)
    score = (h @ p["wr"] + p["br"])[:, 0]
    prob = jax.nn.sigmoid((h @ p["wc"] + p["bc"])[:, 0])
    return score, prob


if __name__ == "__main__":
    key = jax.random.PRNGKey(0)
    k_x, k_p, k_x2 = jax.random.split(key, 3)

    B, D = 8, 32
    x = jax.random.normal(k_x, (B, D), jnp.float32)
    raw = init_params(k_p, D)

    # 1) f32 compute path, strict check against the unfused reference.
    p_f32 = fold_params(raw, jnp.float32)
    score, prob = multi_task_rank_net(x, p_f32)
    jax.block_until_ready((score, prob))
    ref_score, ref_prob = _reference(x, raw)
    assert score.shape == (B,) and prob.shape == (B,)
    assert jnp.allclose(score, ref_score, atol=1e-4, rtol=1e-4)
    assert jnp.allclose(prob, ref_prob, atol=1e-5, rtol=1e-5)

    # 2) Multi-tile + padded-batch path (requested tb=64 is promoted to 128 so
    #    the lane-dense output block stays legal; grid=(2,), 56 padded rows).
    B2 = 200
    x2 = jax.random.normal(k_x2, (B2, D), jnp.float32)
    score2, prob2 = multi_task_rank_net(x2, p_f32, tb=64)
    jax.block_until_ready((score2, prob2))
    ref_score2, ref_prob2 = _reference(x2, raw)
    assert score2.shape == (B2,) and prob2.shape == (B2,)
    assert jnp.allclose(score2, ref_score2, atol=1e-4, rtol=1e-4)
    assert jnp.allclose(prob2, ref_prob2, atol=1e-5, rtol=1e-5)

    # 3) Default bf16 matmul operands (f32 accumulation / epilogue), looser tol.
    p_bf16 = fold_params(raw)
    score3, prob3 = multi_task_rank_net(x, p_bf16)
    jax.block_until_ready((score3, prob3))
    assert jnp.allclose(score3, ref_score, atol=5e-2, rtol=5e-2)
    assert jnp.allclose(prob3, ref_prob, atol=5e-2, rtol=5e-2)

    print("KERNEL_OK")
</pallas_src>

<mosaic_0001>
module attributes {stable_mosaic.version = 11 : i64} {
  func.func @_mtrn_kernel(%arg0: i32, %arg1: memref<8x32xf32, #tpu.memory_space<vmem>>, %arg2: memref<32x256xf32, #tpu.memory_space<vmem>>, %arg3: memref<1x256xf32, #tpu.memory_space<vmem>>, %arg4: memref<256x128xf32, #tpu.memory_space<vmem>>, %arg5: memref<1x128xf32, #tpu.memory_space<vmem>>, %arg6: memref<2x128xf32, #tpu.memory_space<vmem>>, %arg7: memref<2x1xf32, #tpu.memory_space<vmem>>, %arg8: memref<2x8xf32, #tpu.memory_space<vmem>>) attributes {dimension_semantics = [#tpu.dimension_semantics<parallel>], iteration_bounds = array<i64: 1>, scalar_prefetch = 0 : i64, scratch_operands = 0 : i64, tpu.core_type = #tpu.core_type<tc>, window_params = [{transform_indices = @transform_0, window_bounds = array<i64: 8, 32>}, {pipeline_mode = #tpu.pipeline_mode<synchronous>, transform_indices = @transform_1, window_bounds = array<i64: 32, 256>}, {pipeline_mode = #tpu.pipeline_mode<synchronous>, transform_indices = @transform_2, window_bounds = array<i64: 1, 256>}, {pipeline_mode = #tpu.pipeline_mode<synchronous>, transform_indices = @transform_3, window_bounds = array<i64: 256, 128>}, {pipeline_mode = #tpu.pipeline_mode<synchronous>, transform_indices = @transform_4, window_bounds = array<i64: 1, 128>}, {pipeline_mode = #tpu.pipeline_mode<synchronous>, transform_indices = @transform_5, window_bounds = array<i64: 2, 128>}, {pipeline_mode = #tpu.pipeline_mode<synchronous>, transform_indices = @transform_6, window_bounds = array<i64: 2, 1>}, {transform_indices = @transform_7, window_bounds = array<i64: 2, 8>}]} {
    %c0 = arith.constant 0 : index
    %c0_0 = arith.constant 0 : index
    %0 = vector.load %arg1[%c0, %c0_0] : memref<8x32xf32, #tpu.memory_space<vmem>>, vector<8x32xf32>
    %c0_1 = arith.constant 0 : index
    %c0_2 = arith.constant 0 : index
    %1 = vector.load %arg2[%c0_1, %c0_2] : memref<32x256xf32, #tpu.memory_space<vmem>>, vector<32x256xf32>
    %cst = arith.constant dense<0.000000e+00> : vector<8x256xf32>
    %2 = tpu.matmul %0, %1, %cst {dimension_numbers = #tpu.dot_dimension_numbers<[1], [0], [0], [1], [0, 0, 1, 1], [], []>} : vector<8x32xf32>, vector<32x256xf32>, vector<8x256xf32> -> vector<8x256xf32>
    %c0_3 = arith.constant 0 : index
    %c0_4 = arith.constant 0 : index
    %3 = vector.load %arg3[%c0_3, %c0_4] : memref<1x256xf32, #tpu.memory_space<vmem>>, vector<1x256xf32>
    %4 = vector.broadcast %3 : vector<1x256xf32> to vector<8x256xf32>
    %5 = arith.addf %2, %4 : vector<8x256xf32>
    %cst_5 = arith.constant 0.000000e+00 : f32
    %6 = vector.broadcast %cst_5 : f32 to vector<8x256xf32>
    %7 = arith.maximumf %5, %6 : vector<8x256xf32>
    %c0_6 = arith.constant 0 : index
    %c0_7 = arith.constant 0 : index
    %8 = vector.load %arg4[%c0_6, %c0_7] : memref<256x128xf32, #tpu.memory_space<vmem>>, vector<256x128xf32>
    %cst_8 = arith.constant dense<0.000000e+00> : vector<8x128xf32>
    %9 = tpu.matmul %7, %8, %cst_8 {dimension_numbers = #tpu.dot_dimension_numbers<[1], [0], [0], [1], [0, 0, 1, 1], [], []>} : vector<8x256xf32>, vector<256x128xf32>, vector<8x128xf32> -> vector<8x128xf32>
    %c0_9 = arith.constant 0 : index
    %c0_10 = arith.constant 0 : index
    %10 = vector.load %arg5[%c0_9, %c0_10] : memref<1x128xf32, #tpu.memory_space<vmem>>, vector<1x128xf32>
    %11 = vector.broadcast %10 : vector<1x128xf32> to vector<8x128xf32>
    %12 = arith.addf %9, %11 : vector<8x128xf32>
    %cst_11 = arith.constant 0.000000e+00 : f32
    %13 = vector.broadcast %cst_11 : f32 to vector<8x128xf32>
    %14 = arith.maximumf %12, %13 : vector<8x128xf32>
    %c0_12 = arith.constant 0 : index
    %c0_13 = arith.constant 0 : index
    %15 = vector.load %arg6[%c0_12, %c0_13] : memref<2x128xf32, #tpu.memory_space<vmem>>, vector<2x128xf32>
    %cst_14 = arith.constant dense<0.000000e+00> : vector<2x8xf32>
    %16 = tpu.matmul %15, %14, %cst_14 {dimension_numbers = #tpu.dot_dimension_numbers<[1], [1], [0], [0], [0, 0, 1, 0], [], []>} : vector<2x128xf32>, vector<8x128xf32>, vector<2x8xf32> -> vector<2x8xf32>
    %c0_15 = arith.constant 0 : index
    %c0_16 = arith.constant 0 : index
    %17 = vector.load %arg7[%c0_15, %c0_16] : memref<2x1xf32, #tpu.memory_space<vmem>>, vector<2x1xf32>
    %18 = vector.broadcast %17 : vector<2x1xf32> to vector<2x8xf32>
    %19 = arith.addf %16, %18 : vector<2x8xf32>
    %20 = tpu.iota {dimensions = array<i32: 0>} : vector<2x8xi32>
    %c0_i32 = arith.constant 0 : i32
    %21 = vector.broadcast %c0_i32 : i32 to vector<2x8xi32>
    %22 = arith.cmpi eq, %20, %21 : vector<2x8xi32>
    %23 = arith.negf %19 : vector<2x8xf32>
    %24 = math.exp %23 : vector<2x8xf32>
    %cst_17 = arith.constant 1.000000e+00 : f32
    %25 = vector.broadcast %cst_17 : f32 to vector<2x8xf32>
    %26 = arith.addf %25, %24 : vector<2x8xf32>
    %27 = arith.divf %25, %26 : vector<2x8xf32>
    %28 = arith.select %22, %19, %27 : vector<2x8xi1>, vector<2x8xf32>
    %c0_18 = arith.constant 0 : index
    %c0_19 = arith.constant 0 : index
    %29 = vector.load %arg8[%c0_18, %c0_19] : memref<2x8xf32, #tpu.memory_space<vmem>>, vector<2x8xf32>
    tpu.vector_store %arg8[%c0_18, %c0_19], %28 {strides = array<i32>} : memref<2x8xf32, #tpu.memory_space<vmem>>, vector<2x8xf32>,
    return
  }
  func.func @transform_0(%arg0: i32) -> (i32, i32) {
    %c0_i32 = arith.constant 0 : i32
    %c0_i32_0 = arith.constant 0 : i32
    return %arg0, %c0_i32 : i32, i32
  }
  func.func @transform_1(%arg0: i32) -> (i32, i32) {
    %c0_i32 = arith.constant 0 : i32
    %c0_i32_0 = arith.constant 0 : i32
    %c0_i32_1 = arith.constant 0 : i32
    return %c0_i32, %c0_i32_0 : i32, i32
  }
  func.func @transform_2(%arg0: i32) -> (i32, i32) {
    %c0_i32 = arith.constant 0 : i32
    %c0_i32_0 = arith.constant 0 : i32
    %c0_i32_1 = arith.constant 0 : i32
    return %c0_i32, %c0_i32_0 : i32, i32
  }
  func.func @transform_3(%arg0: i32) -> (i32, i32) {
    %c0_i32 = arith.constant 0 : i32
    %c0_i32_0 = arith.constant 0 : i32
    %c0_i32_1 = arith.constant 0 : i32
    return %c0_i32, %c0_i32_0 : i32, i32
  }
  func.func @transform_4(%arg0: i32) -> (i32, i32) {
    %c0_i32 = arith.constant 0 : i32
    %c0_i32_0 = arith.constant 0 : i32
    %c0_i32_1 = arith.constant 0 : i32
    return %c0_i32, %c0_i32_0 : i32, i32
  }
  func.func @transform_5(%arg0: i32) -> (i32, i32) {
    %c0_i32 = arith.constant 0 : i32
    %c0_i32_0 = arith.constant 0 : i32
    %c0_i32_1 = arith.constant 0 : i32
    return %c0_i32, %c0_i32_0 : i32, i32
  }
  func.func @transform_6(%arg0: i32) -> (i32, i32) {
    %c0_i32 = arith.constant 0 : i32
    %c0_i32_0 = arith.constant 0 : i32
    %c0_i32_1 = arith.constant 0 : i32
    return %c0_i32, %c0_i32_0 : i32, i32
  }
  func.func @transform_7(%arg0: i32) -> (i32, i32) {
    %c0_i32 = arith.constant 0 : i32
    %c0_i32_0 = arith.constant 0 : i32
    return %c0_i32, %arg0 : i32, i32
  }
}

module attributes {stable_mosaic.version = 11 : i64} {
  func.func @_mtrn_kernel(%arg0: i32, %arg1: memref<8x32xf32, #tpu.memory_space<vmem>>, %arg2: memref<32x256xf32, #tpu.memory_space<vmem>>, %arg3: memref<1x256xf32, #tpu.memory_space<vmem>>, %arg4: memref<256x128xf32, #tpu.memory_space<vmem>>, %arg5: memref<1x128xf32, #tpu.memory_space<vmem>>, %arg6: memref<2x128xf32, #tpu.memory_space<vmem>>, %arg7: memref<2x1xf32, #tpu.memory_space<vmem>>, %arg8: memref<2x8xf32, #tpu.memory_space<vmem>>) attributes {dimension_semantics = [#tpu.dimension_semantics<parallel>], iteration_bounds = array<i64: 1>, scalar_prefetch = 0 : i64, scratch_operands = 0 : i64, tpu.core_type = #tpu.core_type<tc>, window_params = [{transform_indices = @transform_0, window_bounds = array<i64: 8, 32>}, {pipeline_mode = #tpu.pipeline_mode<synchronous>, transform_indices = @transform_1, window_bounds = array<i64: 32, 256>}, {pipeline_mode = #tpu.pipeline_mode<synchronous>, transform_indices = @transform_2, window_bounds = array<i64: 1, 256>}, {pipeline_mode = #tpu.pipeline_mode<synchronous>, transform_indices = @transform_3, window_bounds = array<i64: 256, 128>}, {pipeline_mode = #tpu.pipeline_mode<synchronous>, transform_indices = @transform_4, window_bounds = array<i64: 1, 128>}, {pipeline_mode = #tpu.pipeline_mode<synchronous>, transform_indices = @transform_5, window_bounds = array<i64: 2, 128>}, {pipeline_mode = #tpu.pipeline_mode<synchronous>, transform_indices = @transform_6, window_bounds = array<i64: 2, 1>}, {transform_indices = @transform_7, window_bounds = array<i64: 2, 8>}]} {
    %c0 = arith.constant 0 : index
    %c0_0 = arith.constant 0 : index
    %0 = vector.load %arg1[%c0, %c0_0] : memref<8x32xf32, #tpu.memory_space<vmem>>, vector<8x32xf32>
    %c0_1 = arith.constant 0 : index
    %c0_2 = arith.constant 0 : index
    %1 = vector.load %arg2[%c0_1, %c0_2] : memref<32x256xf32, #tpu.memory_space<vmem>>, vector<32x256xf32>
    %cst = arith.constant dense<0.000000e+00> : vector<8x256xf32>
    %2 = tpu.matmul %0, %1, %cst {dimension_numbers = #tpu.dot_dimension_numbers<[1], [0], [0], [1], [0, 0, 1, 1], [], []>} : vector<8x32xf32>, vector<32x256xf32>, vector<8x256xf32> -> vector<8x256xf32>
    %c0_3 = arith.constant 0 : index
    %c0_4 = arith.constant 0 : index
    %3 = vector.load %arg3[%c0_3, %c0_4] : memref<1x256xf32, #tpu.memory_space<vmem>>, vector<1x256xf32>
    %4 = vector.broadcast %3 : vector<1x256xf32> to vector<8x256xf32>
    %5 = arith.addf %2, %4 : vector<8x256xf32>
    %cst_5 = arith.constant 0.000000e+00 : f32
    %6 = vector.broadcast %cst_5 : f32 to vector<8x256xf32>
    %7 = arith.maximumf %5, %6 : vector<8x256xf32>
    %c0_6 = arith.constant 0 : index
    %c0_7 = arith.constant 0 : index
    %8 = vector.load %arg4[%c0_6, %c0_7] : memref<256x128xf32, #tpu.memory_space<vmem>>, vector<256x128xf32>
    %cst_8 = arith.constant dense<0.000000e+00> : vector<8x128xf32>
    %9 = tpu.matmul %7, %8, %cst_8 {dimension_numbers = #tpu.dot_dimension_numbers<[1], [0], [0], [1], [0, 0, 1, 1], [], []>} : vector<8x256xf32>, vector<256x128xf32>, vector<8x128xf32> -> vector<8x128xf32>
    %c0_9 = arith.constant 0 : index
    %c0_10 = arith.constant 0 : index
    %10 = vector.load %arg5[%c0_9, %c0_10] : memref<1x128xf32, #tpu.memory_space<vmem>>, vector<1x128xf32>
    %11 = vector.broadcast %10 : vector<1x128xf32> to vector<8x128xf32>
    %12 = arith.addf %9, %11 : vector<8x128xf32>
    %cst_11 = arith.constant 0.000000e+00 : f32
    %13 = vector.broadcast %cst_11 : f32 to vector<8x128xf32>
    %14 = arith.maximumf %12, %13 : vector<8x128xf32>
    %c0_12 = arith.constant 0 : index
    %c0_13 = arith.constant 0 : index
    %15 = vector.load %arg6[%c0_12, %c0_13] : memref<2x128xf32, #tpu.memory_space<vmem>>, vector<2x128xf32>
    %cst_14 = arith.constant dense<0.000000e+00> : vector<2x8xf32>
    %16 = tpu.matmul %15, %14, %cst_14 {dimension_numbers = #tpu.dot_dimension_numbers<[1], [1], [0], [0], [0, 0, 1, 0], [], []>} : vector<2x128xf32>, vector<8x128xf32>, vector<2x8xf32> -> vector<2x8xf32>
    %c0_15 = arith.constant 0 : index
    %c0_16 = arith.constant 0 : index
    %17 = vector.load %arg7[%c0_15, %c0_16] : memref<2x1xf32, #tpu.memory_space<vmem>>, vector<2x1xf32>
    %18 = vector.broadcast %17 : vector<2x1xf32> to vector<2x8xf32>
    %19 = arith.addf %16, %18 : vector<2x8xf32>
    %20 = tpu.iota {dimensions = array<i32: 0>} : vector<2x8xi32>
    %c0_i32 = arith.constant 0 : i32
    %21 = vector.broadcast %c0_i32 : i32 to vector<2x8xi32>
    %22 = arith.cmpi eq, %20, %21 : vector<2x8xi32>
    %23 = arith.negf %19 : vector<2x8xf32>
    %24 = math.exp %23 : vector<2x8xf32>
    %cst_17 = arith.constant 1.000000e+00 : f32
    %25 = vector.broadcast %cst_17 : f32 to vector<2x8xf32>
    %26 = arith.addf %25, %24 : vector<2x8xf32>
    %27 = arith.divf %25, %26 : vector<2x8xf32>
    %28 = arith.select %22, %19, %27 : vector<2x8xi1>, vector<2x8xf32>
    %c0_18 = arith.constant 0 : index
    %c0_19 = arith.constant 0 : index
    %29 = vector.load %arg8[%c0_18, %c0_19] : memref<2x8xf32, #tpu.memory_space<vmem>>, vector<2x8xf32>
    tpu.vector_store %arg8[%c0_18, %c0_19], %28 {strides = array<i32>} : memref<2x8xf32, #tpu.memory_space<vmem>>, vector<2x8xf32>,
    return
  }
  func.func @transform_0(%arg0: i32) -> (i32, i32) {
    %c0_i32 = arith.constant 0 : i32
    %c0_i32_0 = arith.constant 0 : i32
    return %arg0, %c0_i32 : i32, i32
  }
  func.func @transform_1(%arg0: i32) -> (i32, i32) {
    %c0_i32 = arith.constant 0 : i32
    %c0_i32_0 = arith.constant 0 : i32
    %c0_i32_1 = arith.constant 0 : i32
    return %c0_i32, %c0_i32_0 : i32, i32
  }
  func.func @transform_2(%arg0: i32) -> (i32, i32) {
    %c0_i32 = arith.constant 0 : i32
    %c0_i32_0 = arith.constant 0 : i32
    %c0_i32_1 = arith.constant 0 : i32
    return %c0_i32, %c0_i32_0 : i32, i32
  }
  func.func @transform_3(%arg0: i32) -> (i32, i32) {
    %c0_i32 = arith.constant 0 : i32
    %c0_i32_0 = arith.constant 0 : i32
    %c0_i32_1 = arith.constant 0 : i32
    return %c0_i32, %c0_i32_0 : i32, i32
  }
  func.func @transform_4(%arg0: i32) -> (i32, i32) {
    %c0_i32 = arith.constant 0 : i32
    %c0_i32_0 = arith.constant 0 : i32
    %c0_i32_1 = arith.constant 0 : i32
    return %c0_i32, %c0_i32_0 : i32, i32
  }
  func.func @transform_5(%arg0: i32) -> (i32, i32) {
    %c0_i32 = arith.constant 0 : i32
    %c0_i32_0 = arith.constant 0 : i32
    %c0_i32_1 = arith.constant 0 : i32
    return %c0_i32, %c0_i32_0 : i32, i32
  }
  func.func @transform_6(%arg0: i32) -> (i32, i32) {
    %c0_i32 = arith.constant 0 : i32
    %c0_i32_0 = arith.constant 0 : i32
    %c0_i32_1 = arith.constant 0 : i32
    return %c0_i32, %c0_i32_0 : i32, i32
  }
  func.func @transform_7(%arg0: i32) -> (i32, i32) {
    %c0_i32 = arith.constant 0 : i32
    %c0_i32_0 = arith.constant 0 : i32
    return %c0_i32, %arg0 : i32, i32
  }
}

</mosaic_0001>

<llo_original>
// kernel: tpu_custom_call.1
$region0: #{tpu_custom_call.1}
  #allocation0 [shape = 'u32[]', space=smem, size = 0x4, offset = 0x4, fixed_abs, tag = 'smem constant byte address 0x4 - core index']
  #allocation1 [shape = 'u32[144,128]{1,0:T(1,128)}', space=vmem, size = 0x12000, scoped, tag = 'internal scratch']
  %s0 = inlined_call_operand.hbm [shape: f32[8,32], index: 0, kind: input, shape index: {}]
  %s1 = inlined_call_operand.hbm [shape: f32[32,256], index: 1, kind: input, shape index: {}]
  %s2 = inlined_call_operand.vmem [shape: f32[1,256], index: 2, kind: input, shape index: {}]
  %s3 = inlined_call_operand.hbm [shape: f32[256,128], index: 3, kind: input, shape index: {}]
  %s4 = inlined_call_operand.vmem [shape: f32[1,128], index: 4, kind: input, shape index: {}]
  %s5 = inlined_call_operand.vmem [shape: f32[2,128], index: 5, kind: input, shape index: {}]
  %s6 = inlined_call_operand.vmem [shape: f32[2,1], index: 6, kind: input, shape index: {}]
  %s7 = inlined_call_operand.hbm [shape: f32[2,8], index: 7, kind: output, shape index: {}]
  %s8 = sld [smem:[#allocation0]]
  $region50: #{tpu_custom_call.1} parent=0
    _
  %s10 = ssub.s32 1, %s8
  %s11 = scalar_select 0, %s10, %s8
  $region1: #{tpu_custom_call.1} parent=0
    #allocation2 [shape = 'u8[4096]{0}', space=vmem, size = 0x1000, scoped, tag = 'input window, operand 0, single buffered']
    #allocation3 [shape = 's32[1]{0}', space=sflag, size = 0x4, scoped, tag = 'scoped memory for tpu_custom_call.1']
    #allocation4 [shape = 's32[1]{0}', space=sflag, size = 0x4, scoped, tag = 'scoped memory for tpu_custom_call.1']
    #allocation5 [shape = 'u8[32768]{0}', space=vmem, size = 0x8000, scoped, tag = 'input window, operand 1, single buffered']
    #allocation6 [shape = 's32[1]{0}', space=sflag, size = 0x4, scoped, tag = 'scoped memory for tpu_custom_call.1']
    #allocation7 [shape = 'u8[131072]{0}', space=vmem, size = 0x20000, scoped, tag = 'input window, operand 3, single buffered']
    #allocation8 [shape = 'u8[1024]{0}', space=vmem, size = 0x400, scoped, tag = 'output window, operand 0, single buffered']
    %12 = vsyncpa [#allocation3], 0
    %13 = vsyncpa [#allocation6], 0
    %14 = vsyncpa [#allocation4], 0
    // Predicated region
    $region2: #{tpu_custom_call.1} parent=1 // pred_check
      _
    $region3: #{tpu_custom_call.1} parent=1 // pred_check_branch
      %16 = sbr.rel (0) target = $region5
    $region4: #{tpu_custom_call.1} parent=1 // pred_region
      %s18 = ssub.s32 128, 128
      %19 = vsyncadd [#allocation3], %s18
      %s21 = sshll.u32 [#allocation2], 4
      %s22 = int_to_ptr.vmem [resolvable:$true] %s21
      %24 = dma.hbm_to_vmem [thread:$0]  %s0, 128, %s22, [#allocation3]
    $region5: #{tpu_custom_call.1} parent=1 // pred_fallthru
      _
    // Predicated region
    $region6: #{tpu_custom_call.1} parent=1 // pred_check
      _
    $region7: #{tpu_custom_call.1} parent=1 // pred_check_branch
      %26 = sbr.rel (0) target = $region9
    $region8: #{tpu_custom_call.1} parent=1 // pred_region
      %s28 = ssub.s32 1024, 1024
      %29 = vsyncadd [#allocation6], %s28
      %s30 = sshll.u32 [#allocation5], 4
      %s31 = int_to_ptr.vmem [resolvable:$true] %s30
      %36 = dma.hbm_to_vmem [thread:$0]  %s1, 1024, %s31, [#allocation6], 256, 256, 16
    $region9: #{tpu_custom_call.1} parent=1 // pred_fallthru
      _
    // Predicated region
    $region10: #{tpu_custom_call.1} parent=1 // pred_check
      _
    $region11: #{tpu_custom_call.1} parent=1 // pred_check_branch
      %38 = sbr.rel (0) target = $region13
    $region12: #{tpu_custom_call.1} parent=1 // pred_region
      _
    $region13: #{tpu_custom_call.1} parent=1 // pred_fallthru
      _
    // Predicated region
    $region14: #{tpu_custom_call.1} parent=1 // pred_check
      _
    $region15: #{tpu_custom_call.1} parent=1 // pred_check_branch
      %40 = sbr.rel (0) target = $region17
    $region16: #{tpu_custom_call.1} parent=1 // pred_region
      %s42 = ssub.s32 4096, 4096
      %43 = vsyncadd [#allocation6], %s42
      %s44 = sshll.u32 [#allocation7], 4
      %s45 = int_to_ptr.vmem [resolvable:$true] %s44
      %50 = dma.hbm_to_vmem [thread:$0]  %s3, 4096, %s45, [#allocation6], 128, 128, 8
    $region17: #{tpu_custom_call.1} parent=1 // pred_fallthru
      _
    // Predicated region
    $region18: #{tpu_custom_call.1} parent=1 // pred_check
      _
    $region19: #{tpu_custom_call.1} parent=1 // pred_check_branch
      %52 = sbr.rel (0) target = $region21
    $region20: #{tpu_custom_call.1} parent=1 // pred_region
      _
    $region21: #{tpu_custom_call.1} parent=1 // pred_fallthru
      _
    // Predicated region
    $region22: #{tpu_custom_call.1} parent=1 // pred_check
      _
    $region23: #{tpu_custom_call.1} parent=1 // pred_check_branch
      %54 = sbr.rel (0) target = $region25
    $region24: #{tpu_custom_call.1} parent=1 // pred_region
      _
    $region25: #{tpu_custom_call.1} parent=1 // pred_fallthru
      _
    // Predicated region
    $region26: #{tpu_custom_call.1} parent=1 // pred_check
      _
    $region27: #{tpu_custom_call.1} parent=1 // pred_check_branch
      %56 = sbr.rel (0) target = $region29
    $region28: #{tpu_custom_call.1} parent=1 // pred_region
      _
    $region29: #{tpu_custom_call.1} parent=1 // pred_fallthru
      _
    // Predicated region
    $region30: #{tpu_custom_call.1} parent=1 // pred_check
      _
    $region31: #{tpu_custom_call.1} parent=1 // pred_check_branch
      %58 = sbr.rel (0) target = $region33
    $region32: #{tpu_custom_call.1} parent=1 // pred_region
      %59 = dma.done [#allocation3], 128
    $region33: #{tpu_custom_call.1} parent=1 // pred_fallthru
      _
    // Predicated region
    $region34: #{tpu_custom_call.1} parent=1 // pred_check
      _
    $region35: #{tpu_custom_call.1} parent=1 // pred_check_branch
      %61 = sbr.rel (0) target = $region37
    $region36: #{tpu_custom_call.1} parent=1 // pred_region
      %62 = dma.done [#allocation6], 1024
    $region37: #{tpu_custom_call.1} parent=1 // pred_fallthru
      _
    // Predicated region
    $region38: #{tpu_custom_call.1} parent=1 // pred_check
      _
    $region39: #{tpu_custom_call.1} parent=1 // pred_check_branch
      %64 = sbr.rel (0) target = $region41
    $region40: #{tpu_custom_call.1} parent=1 // pred_region
      %65 = dma.done [#allocation6], 4096
    $region41: #{tpu_custom_call.1} parent=1 // pred_fallthru
      _
    %v66 = vld [vmem:[#allocation2] sm:$0xff]
    %v67 = vld [vmem:[#allocation5] sm:$0xff]
    %v68 = vld [vmem:[#allocation5 + $0x8] sm:$0xff]
    %v69 = vld [vmem:[#allocation5 + $0x10] sm:$0xff]
    %v70 = vld [vmem:[#allocation5 + $0x18] sm:$0xff]
    %v71 = vld [vmem:[#allocation5 + $0x20] sm:$0xff]
    %v72 = vld [vmem:[#allocation5 + $0x28] sm:$0xff]
    %v73 = vld [vmem:[#allocation5 + $0x30] sm:$0xff]
    %v74 = vld [vmem:[#allocation5 + $0x38] sm:$0xff]
    %v75 = vld [vmem:[%s2] sm:$0x3]
    %v77 = vlaneseq
    %v78 = vshrl.u32 %v77, 7
    %v79 = vsub.s32 0, %v78
    %v80 = vrot.slane %v75, %v79
    %v81 = vlaneseq
    %v82 = vshrl.u32 %v81, 7
    %v83 = vsub.s32 1, %v82
    %v84 = vrot.slane %v75, %v83
    %vm87 = vcmask 261120
    %v89 = vsel %vm87, %v66, 0
    %91 = vmatprep.subr.mxu0 0.0
    %92 = vmatpush1.msra.mxu0 0.0
    %93 = vmatprep.subr.mxu0 0.0
    %94 = vmatpush1.msra.mxu0 0.0
    %95 = vmatprep.subr.mxu0 0.0
    %96 = vmatpush1.msra.mxu0 0.0
    %97 = vmatprep.subr.mxu0 0.0
    %98 = vmatpush1.msra.mxu0 0.0
    %99 = vmatprep.subr.mxu0 0.0
    %100 = vmatpush1.msra.mxu0 0.0
    %101 = vmatprep.subr.mxu0 0.0
    %102 = vmatpush1.msra.mxu0 0.0
    %103 = vmatprep.subr.mxu0 0.0
    %104 = vmatpush1.msra.mxu0 0.0
    %105 = vmatprep.subr.mxu0 0.0
    %106 = vmatpush1.msra.mxu0 0.0
    %107 = vmatprep.subr.mxu0 0.0
    %108 = vmatpush1.msra.mxu0 0.0
    %109 = vmatprep.subr.mxu0 0.0
    %110 = vmatpush1.msra.mxu0 0.0
    %111 = vmatprep.subr.mxu0 0.0
    %112 = vmatpush1.msra.mxu0 0.0
    %113 = vmatprep.subr.mxu0 0.0
    %114 = vmatpush1.msra.mxu0 0.0
    %115 = vmatprep.subr.mxu0 %v74
    %116 = vmatpush1.msra.mxu0 %v73
    %117 = vmatprep.subr.mxu0 %v72
    %118 = vmatpush1.msra.mxu0 %v71
    %119 = vmatprep.subr.mxu0 %v70
    %120 = vmatpush1.msra.mxu0 %v69
    %121 = vmatprep.subr.mxu0 %v68
    %122 = vmatpush1.msra.mxu0 %v67
    %123 = vmatprep.subr.mxu0 0.0
    %124 = vmatpush2.msra.mxu0 0.0
    %125 = vmatprep.subr.mxu0 0.0
    %126 = vmatpush2.msra.mxu0 0.0
    %127 = vmatprep.subr.mxu0 0.0
    %128 = vmatpush2.msra.mxu0 0.0
    %129 = vmatprep.subr.mxu0 0.0
    %130 = vmatpush2.msra.mxu0 0.0
    %131 = vmatprep.subr.mxu0 0.0
    %132 = vmatpush2.msra.mxu0 0.0
    %133 = vmatprep.subr.mxu0 0.0
    %134 = vmatpush2.msra.mxu0 0.0
    %135 = vmatprep.subr.mxu0 0.0
    %136 = vmatpush2.msra.mxu0 0.0
    %137 = vmatprep.subr.mxu0 0.0
    %138 = vmatpush2.msra.mxu0 0.0
    %139 = vmatprep.subr.mxu0 0.0
    %140 = vmatpush2.msra.mxu0 0.0
    %141 = vmatprep.subr.mxu0 0.0
    %142 = vmatpush2.msra.mxu0 0.0
    %143 = vmatprep.subr.mxu0 0.0
    %144 = vmatpush2.msra.mxu0 0.0
    %145 = vmatprep.subr.mxu0 0.0
    %146 = vmatpush2.msra.mxu0 0.0
    %147 = vmatprep.subr.mxu0 0.0
    %148 = vmatpush2.msra.mxu0 0.0
    %149 = vmatprep.subr.mxu0 0.0
    %150 = vmatpush2.msra.mxu0 0.0
    %151 = vmatprep.subr.mxu0 0.0
    %152 = vmatpush2.msra.mxu0 0.0
    %153 = vmatprep.subr.mxu0 0.0
    %154 = vmatpush2.msra.mxu0 0.0
    %155 = vmatprep.mubr.f32.mxu0 0.0
    %156 = vmatmul.mubr.f32.gmra.mxu0 %v89
    %v157 = vpop.f32.mrf.mxu0
    %v158 = vadd.f32 %v80, %v157
    %v159 = vpop.f32.mrf.mxu0
    %v160 = vadd.f32 %v84, %v159
    %161 = vdwg.mxu0
    %v162 = vmax.f32 %v158, 0.0
    %v163 = vmax.f32 %v160, 0.0
    %v164 = vld [vmem:[#allocation7] sm:$0xff]
    %v165 = vld [vmem:[#allocation7 + $0x8] sm:$0xff]
    %v166 = vld [vmem:[#allocation7 + $0x10] sm:$0xff]
    %v167 = vld [vmem:[#allocation7 + $0x18] sm:$0xff]
    %v168 = vld [vmem:[#allocation7 + $0x20] sm:$0xff]
    %v169 = vld [vmem:[#allocation7 + $0x28] sm:$0xff]
    %v170 = vld [vmem:[#allocation7 + $0x30] sm:$0xff]
    %v171 = vld [vmem:[#allocation7 + $0x38] sm:$0xff]
    %v172 = vld [vmem:[#allocation7 + $0x40] sm:$0xff]
    %v173 = vld [vmem:[#allocation7 + $0x48] sm:$0xff]
    %v174 = vld [vmem:[#allocation7 + $0x50] sm:$0xff]
    %v175 = vld [vmem:[#allocation7 + $0x58] sm:$0xff]
    %v176 = vld [vmem:[#allocation7 + $0x60] sm:$0xff]
    %v177 = vld [vmem:[#allocation7 + $0x68] sm:$0xff]
    %v178 = vld [vmem:[#allocation7 + $0x70] sm:$0xff]
    %v179 = vld [vmem:[#allocation7 + $0x78] sm:$0xff]
    %v180 = vld [vmem:[#allocation7 + $0x80] sm:$0xff]
    %v181 = vld [vmem:[#allocation7 + $0x88] sm:$0xff]
    %v182 = vld [vmem:[#allocation7 + $0x90] sm:$0xff]
    %v183 = vld [vmem:[#allocation7 + $0x98] sm:$0xff]
    %v184 = vld [vmem:[#allocation7 + $0xa0] sm:$0xff]
    %v185 = vld [vmem:[#allocation7 + $0xa8] sm:$0xff]
    %v186 = vld [vmem:[#allocation7 + $0xb0] sm:$0xff]
    %v187 = vld [vmem:[#allocation7 + $0xb8] sm:$0xff]
    %v188 = vld [vmem:[#allocation7 + $0xc0] sm:$0xff]
    %v189 = vld [vmem:[#allocation7 + $0xc8] sm:$0xff]
    %v190 = vld [vmem:[#allocation7 + $0xd0] sm:$0xff]
    %v191 = vld [vmem:[#allocation7 + $0xd8] sm:$0xff]
    %v192 = vld [vmem:[#allocation7 + $0xe0] sm:$0xff]
    %v193 = vld [vmem:[#allocation7 + $0xe8] sm:$0xff]
    %v194 = vld [vmem:[#allocation7 + $0xf0] sm:$0xff]
    %v195 = vld [vmem:[#allocation7 + $0xf8] sm:$0xff]
    %v196 = vld [vmem:[%s4] sm:$0x1]
    %v198 = vlaneseq
    %v199 = vshrl.u32 %v198, 7
    %v200 = vsub.s32 0, %v199
    %v201 = vrot.slane %v196, %v200
    %203 = vmatprep.subr.mxu0 0.0
    %204 = vmatpush1.msra.mxu0 %v179
    %205 = vmatprep.subr.mxu0 0.0
    %206 = vmatpush1.msra.mxu0 %v178
    %207 = vmatprep.subr.mxu0 0.0
    %208 = vmatpush1.msra.mxu0 %v177
    %209 = vmatprep.subr.mxu0 0.0
    %210 = vmatpush1.msra.mxu0 %v176
    %211 = vmatprep.subr.mxu0 0.0
    %212 = vmatpush1.msra.mxu0 %v175
    %213 = vmatprep.subr.mxu0 0.0
    %214 = vmatpush1.msra.mxu0 %v174
    %215 = vmatprep.subr.mxu0 0.0
    %216 = vmatpush1.msra.mxu0 %v173
    %217 = vmatprep.subr.mxu0 0.0
    %218 = vmatpush1.msra.mxu0 %v172
    %219 = vmatprep.subr.mxu0 0.0
    %220 = vmatpush1.msra.mxu0 %v171
    %221 = vmatprep.subr.mxu0 0.0
    %222 = vmatpush1.msra.mxu0 %v170
    %223 = vmatprep.subr.mxu0 0.0
    %224 = vmatpush1.msra.mxu0 %v169
    %225 = vmatprep.subr.mxu0 0.0
    %226 = vmatpush1.msra.mxu0 %v168
    %227 = vmatprep.subr.mxu0 0.0
    %228 = vmatpush1.msra.mxu0 %v167
    %229 = vmatprep.subr.mxu0 0.0
    %230 = vmatpush1.msra.mxu0 %v166
    %231 = vmatprep.subr.mxu0 0.0
    %232 = vmatpush1.msra.mxu0 %v165
    %233 = vmatprep.subr.mxu0 0.0
    %234 = vmatpush1.msra.mxu0 %v164
    %235 = vmatprep.subr.mxu0 0.0
    %236 = vmatpush2.msra.mxu0 %v195
    %237 = vmatprep.subr.mxu0 0.0
    %238 = vmatpush2.msra.mxu0 %v194
    %239 = vmatprep.subr.mxu0 0.0
    %240 = vmatpush2.msra.mxu0 %v193
    %241 = vmatprep.subr.mxu0 0.0
    %242 = vmatpush2.msra.mxu0 %v192
    %243 = vmatprep.subr.mxu0 0.0
    %244 = vmatpush2.msra.mxu0 %v191
    %245 = vmatprep.subr.mxu0 0.0
    %246 = vmatpush2.msra.mxu0 %v190
    %247 = vmatprep.subr.mxu0 0.0
    %248 = vmatpush2.msra.mxu0 %v189
    %249 = vmatprep.subr.mxu0 0.0
    %250 = vmatpush2.msra.mxu0 %v188
    %251 = vmatprep.subr.mxu0 0.0
    %252 = vmatpush2.msra.mxu0 %v187
    %253 = vmatprep.subr.mxu0 0.0
    %254 = vmatpush2.msra.mxu0 %v186
    %255 = vmatprep.subr.mxu0 0.0
    %256 = vmatpush2.msra.mxu0 %v185
    %257 = vmatprep.subr.mxu0 0.0
    %258 = vmatpush2.msra.mxu0 %v184
    %259 = vmatprep.subr.mxu0 0.0
    %260 = vmatpush2.msra.mxu0 %v183
    %261 = vmatprep.subr.mxu0 0.0
    %262 = vmatpush2.msra.mxu0 %v182
    %263 = vmatprep.subr.mxu0 0.0
    %264 = vmatpush2.msra.mxu0 %v181
    %265 = vmatprep.subr.mxu0 0.0
    %266 = vmatpush2.msra.mxu0 %v180
    %267 = vmatprep.mubr.f32.mxu0 %v163
    %268 = vmatmul.mubr.f32.gmra.mxu0 %v162
    %v269 = vpop.f32.mrf.mxu0
    %v270 = vadd.f32 %v201, %v269
    %v271 = vpop.f32.mrf.mxu0
    %272 = vdwg.mxu0
    %v273 = vmax.f32 %v270, 0.0
    %v274 = vld [vmem:[%s5] sm:$0x3]
    %v275 = vld [vmem:[%s6] sm:$0x3]
    %277 = vset.pattern.permute.xlu0 0
    %278 = vperm.xlu0 %277, %v275
    %v279 = vpop.permute.xlu0 %278
    %281 = vmatprep.subr.mxu0 0.0
    %282 = vmatpush1.xpose.msra.mxu0 0.0
    %283 = vmatprep.subr.mxu0 0.0
    %284 = vmatpush1.xpose.msra.mxu0 0.0
    %285 = vmatprep.subr.mxu0 0.0
    %286 = vmatpush1.xpose.msra.mxu0 0.0
    %287 = vmatprep.subr.mxu0 0.0
    %288 = vmatpush1.xpose.msra.mxu0 0.0
    %289 = vmatprep.subr.mxu0 0.0
    %290 = vmatpush1.xpose.msra.mxu0 0.0
    %291 = vmatprep.subr.mxu0 0.0
    %292 = vmatpush1.xpose.msra.mxu0 0.0
    %293 = vmatprep.subr.mxu0 0.0
    %294 = vmatpush1.xpose.msra.mxu0 0.0
    %295 = vmatprep.subr.mxu0 0.0
    %296 = vmatpush1.xpose.msra.mxu0 0.0
    %297 = vmatprep.subr.mxu0 0.0
    %298 = vmatpush1.xpose.msra.mxu0 0.0
    %299 = vmatprep.subr.mxu0 0.0
    %300 = vmatpush1.xpose.msra.mxu0 0.0
    %301 = vmatprep.subr.mxu0 0.0
    %302 = vmatpush1.xpose.msra.mxu0 0.0
    %303 = vmatprep.subr.mxu0 0.0
    %304 = vmatpush1.xpose.msra.mxu0 0.0
    %305 = vmatprep.subr.mxu0 0.0
    %306 = vmatpush1.xpose.msra.mxu0 0.0
    %307 = vmatprep.subr.mxu0 0.0
    %308 = vmatpush1.xpose.msra.mxu0 0.0
    %309 = vmatprep.subr.mxu0 0.0
    %310 = vmatpush1.xpose.msra.mxu0 0.0
    %311 = vmatprep.subr.mxu0 0.0
    %312 = vmatpush1.xpose.msra.mxu0 %v273
    %313 = vmatprep.subr.mxu0 0.0
    %314 = vmatpush2.xpose.msra.mxu0 0.0
    %315 = vmatprep.subr.mxu0 0.0
    %316 = vmatpush2.xpose.msra.mxu0 0.0
    %317 = vmatprep.subr.mxu0 0.0
    %318 = vmatpush2.xpose.msra.mxu0 0.0
    %319 = vmatprep.subr.mxu0 0.0
    %320 = vmatpush2.xpose.msra.mxu0 0.0
    %321 = vmatprep.subr.mxu0 0.0
    %322 = vmatpush2.xpose.msra.mxu0 0.0
    %323 = vmatprep.subr.mxu0 0.0
    %324 = vmatpush2.xpose.msra.mxu0 0.0
    %325 = vmatprep.subr.mxu0 0.0
    %326 = vmatpush2.xpose.msra.mxu0 0.0
    %327 = vmatprep.subr.mxu0 0.0
    %328 = vmatpush2.xpose.msra.mxu0 0.0
    %329 = vmatprep.subr.mxu0 0.0
    %330 = vmatpush2.xpose.msra.mxu0 0.0
    %331 = vmatprep.subr.mxu0 0.0
    %332 = vmatpush2.xpose.msra.mxu0 0.0
    %333 = vmatprep.subr.mxu0 0.0
    %334 = vmatpush2.xpose.msra.mxu0 0.0
    %335 = vmatprep.subr.mxu0 0.0
    %336 = vmatpush2.xpose.msra.mxu0 0.0
    %337 = vmatprep.subr.mxu0 0.0
    %338 = vmatpush2.xpose.msra.mxu0 0.0
    %339 = vmatprep.subr.mxu0 0.0
    %340 = vmatpush2.xpose.msra.mxu0 0.0
    %341 = vmatprep.subr.mxu0 0.0
    %342 = vmatpush2.xpose.msra.mxu0 0.0
    %343 = vmatprep.subr.mxu0 0.0
    %344 = vmatpush2.xpose.msra.mxu0 0.0
    %345 = vmatprep.mubr.f32.mxu0 0.0
    %346 = vmatmul.mubr.f32.gmra.mxu0 %v274
    %v347 = vpop.f32.mrf.mxu0
    %v348 = vadd.f32 %v279, %v347
    %v349 = vpop.f32.mrf.mxu0
    %350 = vdwg.mxu0
    %v351 = vlaneseq
    %v352 = vshrl.u32 %v351, 7
    %vm353 = vcmp.eq.s32.totalorder %v352, 0
    %v354 = vxor.u32 %v348, 2147483648
    %v355 = vmul.f32 %v354, 1.442695
    %v356 = vpow.pop %v355
    %v357 = vadd.f32 %v356, 1.0
    %v358 = vrcp.pop %v357
    %v359 = vmul.f32 1.0, %v358
    %v360 = vsel %vm353, %v348, %v359
    %vm361 = vcmask 58368
    %362 = vst.msk [vmem:[#allocation8] sm:$0x3] %vm361, %v360
    // Predicated region
    $region42: #{tpu_custom_call.1} parent=1 // pred_check
      _
    $region43: #{tpu_custom_call.1} parent=1 // pred_check_branch
      %364 = sbr.rel (0) target = $region45
    $region44: #{tpu_custom_call.1} parent=1 // pred_region
      %s366 = ssub.s32 32, 32
      %367 = vsyncadd [#allocation4], %s366
      %s369 = sshll.u32 [#allocation8], 4
      %s370 = int_to_ptr.vmem [resolvable:$true] %s369
      %372 = dma.vmem_to_hbm [thread:$0]  %s370, 32, %s7, [#allocation4]
    $region45: #{tpu_custom_call.1} parent=1 // pred_fallthru
      _
    // Predicated region
    $region46: #{tpu_custom_call.1} parent=1 // pred_check
      _
    $region47: #{tpu_custom_call.1} parent=1 // pred_check_branch
      %374 = sbr.rel (0) target = $region49
    $region48: #{tpu_custom_call.1} parent=1 // pred_region
      %375 = dma.done [#allocation4], 32
    $region49: #{tpu_custom_call.1} parent=1 // pred_fallthru
      _
    %376 = vsyncpa [#allocation3], 1
    %377 = vsyncpa [#allocation6], 1
    %378 = vsyncpa [#allocation4], 1

// kernel: tpu_custom_call.1
$region0: #{tpu_custom_call.1}
  #allocation0 [shape = 'u32[]', space=smem, size = 0x4, offset = 0x4, fixed_abs, tag = 'smem constant byte address 0x4 - core index']
  #allocation1 [shape = 'u32[144,128]{1,0:T(1,128)}', space=vmem, size = 0x12000, scoped, tag = 'internal scratch']
  %s0 = inlined_call_operand.hbm [shape: f32[8,32], index: 0, kind: input, shape index: {}]
  %s1 = inlined_call_operand.hbm [shape: f32[32,256], index: 1, kind: input, shape index: {}]
  %s2 = inlined_call_operand.vmem [shape: f32[1,256], index: 2, kind: input, shape index: {}]
  %s3 = inlined_call_operand.hbm [shape: f32[256,128], index: 3, kind: input, shape index: {}]
  %s4 = inlined_call_operand.vmem [shape: f32[1,128], index: 4, kind: input, shape index: {}]
  %s5 = inlined_call_operand.vmem [shape: f32[2,128], index: 5, kind: input, shape index: {}]
  %s6 = inlined_call_operand.vmem [shape: f32[2,1], index: 6, kind: input, shape index: {}]
  %s7 = inlined_call_operand.hbm [shape: f32[2,8], index: 7, kind: output, shape index: {}]
  %s8 = sld [smem:[#allocation0]]
  $region50: #{tpu_custom_call.1} parent=0
    _
  %s10 = ssub.s32 1, %s8
  %s11 = scalar_select 0, %s10, %s8
  $region1: #{tpu_custom_call.1} parent=0
    #allocation2 [shape = 'u8[4096]{0}', space=vmem, size = 0x1000, scoped, tag = 'input window, operand 0, single buffered']
    #allocation3 [shape = 's32[1]{0}', space=sflag, size = 0x4, scoped, tag = 'scoped memory for tpu_custom_call.1']
    #allocation4 [shape = 's32[1]{0}', space=sflag, size = 0x4, scoped, tag = 'scoped memory for tpu_custom_call.1']
    #allocation5 [shape = 'u8[32768]{0}', space=vmem, size = 0x8000, scoped, tag = 'input window, operand 1, single buffered']
    #allocation6 [shape = 's32[1]{0}', space=sflag, size = 0x4, scoped, tag = 'scoped memory for tpu_custom_call.1']
    #allocation7 [shape = 'u8[131072]{0}', space=vmem, size = 0x20000, scoped, tag = 'input window, operand 3, single buffered']
    #allocation8 [shape = 'u8[1024]{0}', space=vmem, size = 0x400, scoped, tag = 'output window, operand 0, single buffered']
    %12 = vsyncpa [#allocation3], 0
    %13 = vsyncpa [#allocation6], 0
    %14 = vsyncpa [#allocation4], 0
    // Predicated region
    $region2: #{tpu_custom_call.1} parent=1 // pred_check
      _
    $region3: #{tpu_custom_call.1} parent=1 // pred_check_branch
      %16 = sbr.rel (0) target = $region5
    $region4: #{tpu_custom_call.1} parent=1 // pred_region
      %s18 = ssub.s32 128, 128
      %19 = vsyncadd [#allocation3], %s18
      %s21 = sshll.u32 [#allocation2], 4
      %s22 = int_to_ptr.vmem [resolvable:$true] %s21
      %24 = dma.hbm_to_vmem [thread:$0]  %s0, 128, %s22, [#allocation3]
    $region5: #{tpu_custom_call.1} parent=1 // pred_fallthru
      _
    // Predicated region
    $region6: #{tpu_custom_call.1} parent=1 // pred_check
      _
    $region7: #{tpu_custom_call.1} parent=1 // pred_check_branch
      %26 = sbr.rel (0) target = $region9
    $region8: #{tpu_custom_call.1} parent=1 // pred_region
      %s28 = ssub.s32 1024, 1024
      %29 = vsyncadd [#allocation6], %s28
      %s30 = sshll.u32 [#allocation5], 4
      %s31 = int_to_ptr.vmem [resolvable:$true] %s30
      %36 = dma.hbm_to_vmem [thread:$0]  %s1, 1024, %s31, [#allocation6], 256, 256, 16
    $region9: #{tpu_custom_call.1} parent=1 // pred_fallthru
      _
    // Predicated region
    $region10: #{tpu_custom_call.1} parent=1 // pred_check
      _
    $region11: #{tpu_custom_call.1} parent=1 // pred_check_branch
      %38 = sbr.rel (0) target = $region13
    $region12: #{tpu_custom_call.1} parent=1 // pred_region
      _
    $region13: #{tpu_custom_call.1} parent=1 // pred_fallthru
      _
    // Predicated region
    $region14: #{tpu_custom_call.1} parent=1 // pred_check
      _
    $region15: #{tpu_custom_call.1} parent=1 // pred_check_branch
      %40 = sbr.rel (0) target = $region17
    $region16: #{tpu_custom_call.1} parent=1 // pred_region
      %s42 = ssub.s32 4096, 4096
      %43 = vsyncadd [#allocation6], %s42
      %s44 = sshll.u32 [#allocation7], 4
      %s45 = int_to_ptr.vmem [resolvable:$true] %s44
      %50 = dma.hbm_to_vmem [thread:$0]  %s3, 4096, %s45, [#allocation6], 128, 128, 8
    $region17: #{tpu_custom_call.1} parent=1 // pred_fallthru
      _
    // Predicated region
    $region18: #{tpu_custom_call.1} parent=1 // pred_check
      _
    $region19: #{tpu_custom_call.1} parent=1 // pred_check_branch
      %52 = sbr.rel (0) target = $region21
    $region20: #{tpu_custom_call.1} parent=1 // pred_region
      _
    $region21: #{tpu_custom_call.1} parent=1 // pred_fallthru
      _
    // Predicated region
    $region22: #{tpu_custom_call.1} parent=1 // pred_check
      _
    $region23: #{tpu_custom_call.1} parent=1 // pred_check_branch
      %54 = sbr.rel (0) target = $region25
    $region24: #{tpu_custom_call.1} parent=1 // pred_region
      _
    $region25: #{tpu_custom_call.1} parent=1 // pred_fallthru
      _
    // Predicated region
    $region26: #{tpu_custom_call.1} parent=1 // pred_check
      _
    $region27: #{tpu_custom_call.1} parent=1 // pred_check_branch
      %56 = sbr.rel (0) target = $region29
    $region28: #{tpu_custom_call.1} parent=1 // pred_region
      _
    $region29: #{tpu_custom_call.1} parent=1 // pred_fallthru
      _
    // Predicated region
    $region30: #{tpu_custom_call.1} parent=1 // pred_check
      _
    $region31: #{tpu_custom_call.1} parent=1 // pred_check_branch
      %58 = sbr.rel (0) target = $region33
    $region32: #{tpu_custom_call.1} parent=1 // pred_region
      %59 = dma.done [#allocation3], 128
    $region33: #{tpu_custom_call.1} parent=1 // pred_fallthru
      _
    // Predicated region
    $region34: #{tpu_custom_call.1} parent=1 // pred_check
      _
    $region35: #{tpu_custom_call.1} parent=1 // pred_check_branch
      %61 = sbr.rel (0) target = $region37
    $region36: #{tpu_custom_call.1} parent=1 // pred_region
      %62 = dma.done [#allocation6], 1024
    $region37: #{tpu_custom_call.1} parent=1 // pred_fallthru
      _
    // Predicated region
    $region38: #{tpu_custom_call.1} parent=1 // pred_check
      _
    $region39: #{tpu_custom_call.1} parent=1 // pred_check_branch
      %64 = sbr.rel (0) target = $region41
    $region40: #{tpu_custom_call.1} parent=1 // pred_region
      %65 = dma.done [#allocation6], 4096
    $region41: #{tpu_custom_call.1} parent=1 // pred_fallthru
      _
    %v66 = vld [vmem:[#allocation2] sm:$0xff]
    %v67 = vld [vmem:[#allocation5] sm:$0xff]
    %v68 = vld [vmem:[#allocation5 + $0x8] sm:$0xff]
    %v69 = vld [vmem:[#allocation5 + $0x10] sm:$0xff]
    %v70 = vld [vmem:[#allocation5 + $0x18] sm:$0xff]
    %v71 = vld [vmem:[#allocation5 + $0x20] sm:$0xff]
    %v72 = vld [vmem:[#allocation5 + $0x28] sm:$0xff]
    %v73 = vld [vmem:[#allocation5 + $0x30] sm:$0xff]
    %v74 = vld [vmem:[#allocation5 + $0x38] sm:$0xff]
    %v75 = vld [vmem:[%s2] sm:$0x3]
    %v77 = vlaneseq
    %v78 = vshrl.u32 %v77, 7
    %v79 = vsub.s32 0, %v78
    %v80 = vrot.slane %v75, %v79
    %v81 = vlaneseq
    %v82 = vshrl.u32 %v81, 7
    %v83 = vsub.s32 1, %v82
    %v84 = vrot.slane %v75, %v83
    %vm87 = vcmask 261120
    %v89 = vsel %vm87, %v66, 0
    %91 = vmatprep.subr.mxu0 0.0
    %92 = vmatpush1.msra.mxu0 0.0
    %93 = vmatprep.subr.mxu0 0.0
    %94 = vmatpush1.msra.mxu0 0.0
    %95 = vmatprep.subr.mxu0 0.0
    %96 = vmatpush1.msra.mxu0 0.0
    %97 = vmatprep.subr.mxu0 0.0
    %98 = vmatpush1.msra.mxu0 0.0
    %99 = vmatprep.subr.mxu0 0.0
    %100 = vmatpush1.msra.mxu0 0.0
    %101 = vmatprep.subr.mxu0 0.0
    %102 = vmatpush1.msra.mxu0 0.0
    %103 = vmatprep.subr.mxu0 0.0
    %104 = vmatpush1.msra.mxu0 0.0
    %105 = vmatprep.subr.mxu0 0.0
    %106 = vmatpush1.msra.mxu0 0.0
    %107 = vmatprep.subr.mxu0 0.0
    %108 = vmatpush1.msra.mxu0 0.0
    %109 = vmatprep.subr.mxu0 0.0
    %110 = vmatpush1.msra.mxu0 0.0
    %111 = vmatprep.subr.mxu0 0.0
    %112 = vmatpush1.msra.mxu0 0.0
    %113 = vmatprep.subr.mxu0 0.0
    %114 = vmatpush1.msra.mxu0 0.0
    %115 = vmatprep.subr.mxu0 %v74
    %116 = vmatpush1.msra.mxu0 %v73
    %117 = vmatprep.subr.mxu0 %v72
    %118 = vmatpush1.msra.mxu0 %v71
    %119 = vmatprep.subr.mxu0 %v70
    %120 = vmatpush1.msra.mxu0 %v69
    %121 = vmatprep.subr.mxu0 %v68
    %122 = vmatpush1.msra.mxu0 %v67
    %123 = vmatprep.subr.mxu0 0.0
    %124 = vmatpush2.msra.mxu0 0.0
    %125 = vmatprep.subr.mxu0 0.0
    %126 = vmatpush2.msra.mxu0 0.0
    %127 = vmatprep.subr.mxu0 0.0
    %128 = vmatpush2.msra.mxu0 0.0
    %129 = vmatprep.subr.mxu0 0.0
    %130 = vmatpush2.msra.mxu0 0.0
    %131 = vmatprep.subr.mxu0 0.0
    %132 = vmatpush2.msra.mxu0 0.0
    %133 = vmatprep.subr.mxu0 0.0
    %134 = vmatpush2.msra.mxu0 0.0
    %135 = vmatprep.subr.mxu0 0.0
    %136 = vmatpush2.msra.mxu0 0.0
    %137 = vmatprep.subr.mxu0 0.0
    %138 = vmatpush2.msra.mxu0 0.0
    %139 = vmatprep.subr.mxu0 0.0
    %140 = vmatpush2.msra.mxu0 0.0
    %141 = vmatprep.subr.mxu0 0.0
    %142 = vmatpush2.msra.mxu0 0.0
    %143 = vmatprep.subr.mxu0 0.0
    %144 = vmatpush2.msra.mxu0 0.0
    %145 = vmatprep.subr.mxu0 0.0
    %146 = vmatpush2.msra.mxu0 0.0
    %147 = vmatprep.subr.mxu0 0.0
    %148 = vmatpush2.msra.mxu0 0.0
    %149 = vmatprep.subr.mxu0 0.0
    %150 = vmatpush2.msra.mxu0 0.0
    %151 = vmatprep.subr.mxu0 0.0
    %152 = vmatpush2.msra.mxu0 0.0
    %153 = vmatprep.subr.mxu0 0.0
    %154 = vmatpush2.msra.mxu0 0.0
    %155 = vmatprep.mubr.f32.mxu0 0.0
    %156 = vmatmul.mubr.f32.gmra.mxu0 %v89
    %v157 = vpop.f32.mrf.mxu0
    %v158 = vadd.f32 %v80, %v157
    %v159 = vpop.f32.mrf.mxu0
    %v160 = vadd.f32 %v84, %v159
    %161 = vdwg.mxu0
    %v162 = vmax.f32 %v158, 0.0
    %v163 = vmax.f32 %v160, 0.0
    %v164 = vld [vmem:[#allocation7] sm:$0xff]
    %v165 = vld [vmem:[#allocation7 + $0x8] sm:$0xff]
    %v166 = vld [vmem:[#allocation7 + $0x10] sm:$0xff]
    %v167 = vld [vmem:[#allocation7 + $0x18] sm:$0xff]
    %v168 = vld [vmem:[#allocation7 + $0x20] sm:$0xff]
    %v169 = vld [vmem:[#allocation7 + $0x28] sm:$0xff]
    %v170 = vld [vmem:[#allocation7 + $0x30] sm:$0xff]
    %v171 = vld [vmem:[#allocation7 + $0x38] sm:$0xff]
    %v172 = vld [vmem:[#allocation7 + $0x40] sm:$0xff]
    %v173 = vld [vmem:[#allocation7 + $0x48] sm:$0xff]
    %v174 = vld [vmem:[#allocation7 + $0x50] sm:$0xff]
    %v175 = vld [vmem:[#allocation7 + $0x58] sm:$0xff]
    %v176 = vld [vmem:[#allocation7 + $0x60] sm:$0xff]
    %v177 = vld [vmem:[#allocation7 + $0x68] sm:$0xff]
    %v178 = vld [vmem:[#allocation7 + $0x70] sm:$0xff]
    %v179 = vld [vmem:[#allocation7 + $0x78] sm:$0xff]
    %v180 = vld [vmem:[#allocation7 + $0x80] sm:$0xff]
    %v181 = vld [vmem:[#allocation7 + $0x88] sm:$0xff]
    %v182 = vld [vmem:[#allocation7 + $0x90] sm:$0xff]
    %v183 = vld [vmem:[#allocation7 + $0x98] sm:$0xff]
    %v184 = vld [vmem:[#allocation7 + $0xa0] sm:$0xff]
    %v185 = vld [vmem:[#allocation7 + $0xa8] sm:$0xff]
    %v186 = vld [vmem:[#allocation7 + $0xb0] sm:$0xff]
    %v187 = vld [vmem:[#allocation7 + $0xb8] sm:$0xff]
    %v188 = vld [vmem:[#allocation7 + $0xc0] sm:$0xff]
    %v189 = vld [vmem:[#allocation7 + $0xc8] sm:$0xff]
    %v190 = vld [vmem:[#allocation7 + $0xd0] sm:$0xff]
    %v191 = vld [vmem:[#allocation7 + $0xd8] sm:$0xff]
    %v192 = vld [vmem:[#allocation7 + $0xe0] sm:$0xff]
    %v193 = vld [vmem:[#allocation7 + $0xe8] sm:$0xff]
    %v194 = vld [vmem:[#allocation7 + $0xf0] sm:$0xff]
    %v195 = vld [vmem:[#allocation7 + $0xf8] sm:$0xff]
    %v196 = vld [vmem:[%s4] sm:$0x1]
    %v198 = vlaneseq
    %v199 = vshrl.u32 %v198, 7
    %v200 = vsub.s32 0, %v199
    %v201 = vrot.slane %v196, %v200
    %203 = vmatprep.subr.mxu0 0.0
    %204 = vmatpush1.msra.mxu0 %v179
    %205 = vmatprep.subr.mxu0 0.0
    %206 = vmatpush1.msra.mxu0 %v178
    %207 = vmatprep.subr.mxu0 0.0
    %208 = vmatpush1.msra.mxu0 %v177
    %209 = vmatprep.subr.mxu0 0.0
    %210 = vmatpush1.msra.mxu0 %v176
    %211 = vmatprep.subr.mxu0 0.0
    %212 = vmatpush1.msra.mxu0 %v175
    %213 = vmatprep.subr.mxu0 0.0
    %214 = vmatpush1.msra.mxu0 %v174
    %215 = vmatprep.subr.mxu0 0.0
    %216 = vmatpush1.msra.mxu0 %v173
    %217 = vmatprep.subr.mxu0 0.0
    %218 = vmatpush1.msra.mxu0 %v172
    %219 = vmatprep.subr.mxu0 0.0
    %220 = vmatpush1.msra.mxu0 %v171
    %221 = vmatprep.subr.mxu0 0.0
    %222 = vmatpush1.msra.mxu0 %v170
    %223 = vmatprep.subr.mxu0 0.0
    %224 = vmatpush1.msra.mxu0 %v169
    %225 = vmatprep.subr.mxu0 0.0
    %226 = vmatpush1.msra.mxu0 %v168
    %227 = vmatprep.subr.mxu0 0.0
    %228 = vmatpush1.msra.mxu0 %v167
    %229 = vmatprep.subr.mxu0 0.0
    %230 = vmatpush1.msra.mxu0 %v166
    %231 = vmatprep.subr.mxu0 0.0
    %232 = vmatpush1.msra.mxu0 %v165
    %233 = vmatprep.subr.mxu0 0.0
    %234 = vmatpush1.msra.mxu0 %v164
    %235 = vmatprep.subr.mxu0 0.0
    %236 = vmatpush2.msra.mxu0 %v195
    %237 = vmatprep.subr.mxu0 0.0
    %238 = vmatpush2.msra.mxu0 %v194
    %239 = vmatprep.subr.mxu0 0.0
    %240 = vmatpush2.msra.mxu0 %v193
    %241 = vmatprep.subr.mxu0 0.0
    %242 = vmatpush2.msra.mxu0 %v192
    %243 = vmatprep.subr.mxu0 0.0
    %244 = vmatpush2.msra.mxu0 %v191
    %245 = vmatprep.subr.mxu0 0.0
    %246 = vmatpush2.msra.mxu0 %v190
    %247 = vmatprep.subr.mxu0 0.0
    %248 = vmatpush2.msra.mxu0 %v189
    %249 = vmatprep.subr.mxu0 0.0
    %250 = vmatpush2.msra.mxu0 %v188
    %251 = vmatprep.subr.mxu0 0.0
    %252 = vmatpush2.msra.mxu0 %v187
    %253 = vmatprep.subr.mxu0 0.0
    %254 = vmatpush2.msra.mxu0 %v186
    %255 = vmatprep.subr.mxu0 0.0
    %256 = vmatpush2.msra.mxu0 %v185
    %257 = vmatprep.subr.mxu0 0.0
    %258 = vmatpush2.msra.mxu0 %v184
    %259 = vmatprep.subr.mxu0 0.0
    %260 = vmatpush2.msra.mxu0 %v183
    %261 = vmatprep.subr.mxu0 0.0
    %262 = vmatpush2.msra.mxu0 %v182
    %263 = vmatprep.subr.mxu0 0.0
    %264 = vmatpush2.msra.mxu0 %v181
    %265 = vmatprep.subr.mxu0 0.0
    %266 = vmatpush2.msra.mxu0 %v180
    %267 = vmatprep.mubr.f32.mxu0 %v163
    %268 = vmatmul.mubr.f32.gmra.mxu0 %v162
    %v269 = vpop.f32.mrf.mxu0
    %v270 = vadd.f32 %v201, %v269
    %v271 = vpop.f32.mrf.mxu0
    %272 = vdwg.mxu0
    %v273 = vmax.f32 %v270, 0.0
    %v274 = vld [vmem:[%s5] sm:$0x3]
    %v275 = vld [vmem:[%s6] sm:$0x3]
    %277 = vset.pattern.permute.xlu0 0
    %278 = vperm.xlu0 %277, %v275
    %v279 = vpop.permute.xlu0 %278
    %281 = vmatprep.subr.mxu0 0.0
    %282 = vmatpush1.xpose.msra.mxu0 0.0
    %283 = vmatprep.subr.mxu0 0.0
    %284 = vmatpush1.xpose.msra.mxu0 0.0
    %285 = vmatprep.subr.mxu0 0.0
    %286 = vmatpush1.xpose.msra.mxu0 0.0
    %287 = vmatprep.subr.mxu0 0.0
    %288 = vmatpush1.xpose.msra.mxu0 0.0
    %289 = vmatprep.subr.mxu0 0.0
    %290 = vmatpush1.xpose.msra.mxu0 0.0
    %291 = vmatprep.subr.mxu0 0.0
    %292 = vmatpush1.xpose.msra.mxu0 0.0
    %293 = vmatprep.subr.mxu0 0.0
    %294 = vmatpush1.xpose.msra.mxu0 0.0
    %295 = vmatprep.subr.mxu0 0.0
    %296 = vmatpush1.xpose.msra.mxu0 0.0
    %297 = vmatprep.subr.mxu0 0.0
    %298 = vmatpush1.xpose.msra.mxu0 0.0
    %299 = vmatprep.subr.mxu0 0.0
    %300 = vmatpush1.xpose.msra.mxu0 0.0
    %301 = vmatprep.subr.mxu0 0.0
    %302 = vmatpush1.xpose.msra.mxu0 0.0
    %303 = vmatprep.subr.mxu0 0.0
    %304 = vmatpush1.xpose.msra.mxu0 0.0
    %305 = vmatprep.subr.mxu0 0.0
    %306 = vmatpush1.xpose.msra.mxu0 0.0
    %307 = vmatprep.subr.mxu0 0.0
    %308 = vmatpush1.xpose.msra.mxu0 0.0
    %309 = vmatprep.subr.mxu0 0.0
    %310 = vmatpush1.xpose.msra.mxu0 0.0
    %311 = vmatprep.subr.mxu0 0.0
    %312 = vmatpush1.xpose.msra.mxu0 %v273
    %313 = vmatprep.subr.mxu0 0.0
    %314 = vmatpush2.xpose.msra.mxu0 0.0
    %315 = vmatprep.subr.mxu0 0.0
    %316 = vmatpush2.xpose.msra.mxu0 0.0
    %317 = vmatprep.subr.mxu0 0.0
    %318 = vmatpush2.xpose.msra.mxu0 0.0
    %319 = vmatprep.subr.mxu0 0.0
    %320 = vmatpush2.xpose.msra.mxu0 0.0
    %321 = vmatprep.subr.mxu0 0.0
    %322 = vmatpush2.xpose.msra.mxu0 0.0
    %323 = vmatprep.subr.mxu0 0.0
    %324 = vmatpush2.xpose.msra.mxu0 0.0
    %325 = vmatprep.subr.mxu0 0.0
    %326 = vmatpush2.xpose.msra.mxu0 0.0
    %327 = vmatprep.subr.mxu0 0.0
    %328 = vmatpush2.xpose.msra.mxu0 0.0
    %329 = vmatprep.subr.mxu0 0.0
    %330 = vmatpush2.xpose.msra.mxu0 0.0
    %331 = vmatprep.subr.mxu0 0.0
    %332 = vmatpush2.xpose.msra.mxu0 0.0
    %333 = vmatprep.subr.mxu0 0.0
    %334 = vmatpush2.xpose.msra.mxu0 0.0
    %335 = vmatprep.subr.mxu0 0.0
    %336 = vmatpush2.xpose.msra.mxu0 0.0
    %337 = vmatprep.subr.mxu0 0.0
    %338 = vmatpush2.xpose.msra.mxu0 0.0
    %339 = vmatprep.subr.mxu0 0.0
    %340 = vmatpush2.xpose.msra.mxu0 0.0
    %341 = vmatprep.subr.mxu0 0.0
    %342 = vmatpush2.xpose.msra.mxu0 0.0
    %343 = vmatprep.subr.mxu0 0.0
    %344 = vmatpush2.xpose.msra.mxu0 0.0
    %345 = vmatprep.mubr.f32.mxu0 0.0
    %346 = vmatmul.mubr.f32.gmra.mxu0 %v274
    %v347 = vpop.f32.mrf.mxu0
    %v348 = vadd.f32 %v279, %v347
    %v349 = vpop.f32.mrf.mxu0
    %350 = vdwg.mxu0
    %v351 = vlaneseq
    %v352 = vshrl.u32 %v351, 7
    %vm353 = vcmp.eq.s32.totalorder %v352, 0
    %v354 = vxor.u32 %v348, 2147483648
    %v355 = vmul.f32 %v354, 1.442695
    %v356 = vpow.pop %v355
    %v357 = vadd.f32 %v356, 1.0
    %v358 = vrcp.pop %v357
    %v359 = vmul.f32 1.0, %v358
    %v360 = vsel %vm353, %v348, %v359
    %vm361 = vcmask 58368
    %362 = vst.msk [vmem:[#allocation8] sm:$0x3] %vm361, %v360
    // Predicated region
    $region42: #{tpu_custom_call.1} parent=1 // pred_check
      _
    $region43: #{tpu_custom_call.1} parent=1 // pred_check_branch
      %364 = sbr.rel (0) target = $region45
    $region44: #{tpu_custom_call.1} parent=1 // pred_region
      %s366 = ssub.s32 32, 32
      %367 = vsyncadd [#allocation4], %s366
      %s369 = sshll.u32 [#allocation8], 4
      %s370 = int_to_ptr.vmem [resolvable:$true] %s369
      %372 = dma.vmem_to_hbm [thread:$0]  %s370, 32, %s7, [#allocation4]
    $region45: #{tpu_custom_call.1} parent=1 // pred_fallthru
      _
    // Predicated region
    $region46: #{tpu_custom_call.1} parent=1 // pred_check
      _
    $region47: #{tpu_custom_call.1} parent=1 // pred_check_branch
      %374 = sbr.rel (0) target = $region49
    $region48: #{tpu_custom_call.1} parent=1 // pred_region
      %375 = dma.done [#allocation4], 32
    $region49: #{tpu_custom_call.1} parent=1 // pred_fallthru
      _
    %376 = vsyncpa [#allocation3], 1
    %377 = vsyncpa [#allocation6], 1
    %378 = vsyncpa [#allocation4], 1

</llo_original>
